<compile_context>
chip_gen: v7x
topology: tpu7x:2x2x1
jax: 0.10.0
libtpu: 0.0.40
codegen_flags: <defaults>
</compile_context>

<pallas_src>
import math

import jax
import jax.numpy as jnp
from jax.experimental import pallas as pl
from jax.experimental.pallas import tpu as pltpu

HIDDEN = 64      # hidden_dim of the PyTorch module
LANES = 128      # TPU vreg lane width
SUBLANES = 8     # TPU vreg sublane count (f32)


def _round_up(x, m):
    return ((x + m - 1) // m) * m


def value_net_kernel(x_ref, w1_ref, b1_ref, w2_ref, b2_ref, w3t_ref, b3_ref, o_ref):
    """Fused 3-layer MLP for one batch tile.

    x_ref   : (blk, state_dim)  native dtype (cast to f32 in-kernel)
    w1_ref  : (state_dim, 64)   f32
    b1_ref  : (1, 64)           f32
    w2_ref  : (64, 64)          f32
    b2_ref  : (1, 64)           f32
    w3t_ref : (8, 64)           f32 (fc3 weight row replicated over 8 sublanes)
    b3_ref  : (1, 1)            f32 scalar in SMEM
    o_ref   : (1, blk)          f32 lane-dense output row
    """
    x = x_ref[...].astype(jnp.float32)

    # fc1 + ReLU  (F32 x F32 -> F32 on the MXU; element-wise stays f32).
    h1 = jnp.dot(x, w1_ref[...], preferred_element_type=jnp.float32)
    h1 = jnp.maximum(h1 + b1_ref[...], 0.0)

    # fc2 + ReLU.
    h2 = jnp.dot(h1, w2_ref[...], preferred_element_type=jnp.float32)
    h2 = jnp.maximum(h2 + b2_ref[...], 0.0)

    # fc3: transpose h2 once (XLU, tile-aligned (blk,64)->(64,blk)), then a
    # tiny (8,64)@(64,blk) matmul; row 0 is the lane-dense (1, blk) result.
    h2_t = jnp.transpose(h2)                                    # (64, blk)
    v = jnp.dot(w3t_ref[...], h2_t,
                preferred_element_type=jnp.float32)             # (8, blk)
    o_ref[...] = (v[0:1, :] + b3_ref[0, 0]).astype(o_ref.dtype)


def value_network_forward(x, params, *, block_b=8192):
    """x: (B, state_dim) -> (B, 1) float32, matching ValueNetwork.forward."""
    w1, b1, w2, b2, w3, b3 = params
    B, state_dim = x.shape

    # ---- batch-tile selection ------------------------------------------------
    # Big tiles amortize the ~0.35us per-grid-step pipeline overhead; blk is a
    # multiple of 128 so the (1, blk) output stays lane-dense (unmasked vst).
    b_lanes = _round_up(max(B, 1), LANES)
    blk = min(_round_up(int(block_b), LANES), b_lanes)
    B_pad = _round_up(B, blk)
    num_blocks = B_pad // blk
    # TODO(synk): on v7x (2 TensorCores) prefer an even number of equal grid
    # steps for medium batches; left as-is since it needs a device-kind query.

    # ---- operand preparation (no full-array cast of x; pad only ragged tail)
    x_in = x
    if B_pad != B:
        x_in = jnp.pad(x_in, ((0, B_pad - B), (0, 0)))
    w1_f = w1.astype(jnp.float32)
    w2_f = w2.astype(jnp.float32)
    w3t_f = jnp.broadcast_to(jnp.reshape(w3.astype(jnp.float32), (1, HIDDEN)),
                             (SUBLANES, HIDDEN))
    b1_f = jnp.reshape(b1, (1, HIDDEN)).astype(jnp.float32)
    b2_f = jnp.reshape(b2, (1, HIDDEN)).astype(jnp.float32)
    b3_f = jnp.reshape(jnp.asarray(b3, jnp.float32), (1, 1))

    x_itemsize = jnp.dtype(x_in.dtype).itemsize
    cost = pl.CostEstimate(
        flops=2 * B_pad * (state_dim * HIDDEN + HIDDEN * HIDDEN + HIDDEN * SUBLANES),
        transcendentals=0,
        bytes_accessed=int(
            B_pad * state_dim * x_itemsize                                  # x stream
            + (state_dim * HIDDEN + HIDDEN * HIDDEN + SUBLANES * HIDDEN) * 4  # weights
            + (2 * HIDDEN + 1) * 4                                          # biases
            + B_pad * 4),                                                   # output row
    )

    out_row = pl.pallas_call(
        value_net_kernel,
        out_shape=jax.ShapeDtypeStruct((1, B_pad), jnp.float32),
        grid_spec=pltpu.PrefetchScalarGridSpec(
            num_scalar_prefetch=0,
            grid=(num_blocks,),
            in_specs=[
                pl.BlockSpec((blk, state_dim), lambda i: (i, 0)),      # x batch tile
                pl.BlockSpec((state_dim, HIDDEN), lambda i: (0, 0)),   # w1 (resident)
                pl.BlockSpec((1, HIDDEN), lambda i: (0, 0)),           # b1
                pl.BlockSpec((HIDDEN, HIDDEN), lambda i: (0, 0)),      # w2
                pl.BlockSpec((1, HIDDEN), lambda i: (0, 0)),           # b2
                pl.BlockSpec((SUBLANES, HIDDEN), lambda i: (0, 0)),    # w3^T replicated
                pl.BlockSpec(memory_space=pltpu.MemorySpace.SMEM),     # b3 scalar
            ],
            out_specs=pl.BlockSpec((1, blk), lambda i: (0, i)),
        ),
        compiler_params=pltpu.CompilerParams(
            dimension_semantics=("parallel",),
            vmem_limit_bytes=32 * 1024 * 1024,
        ),
        cost_estimate=cost,
    )(x_in, w1_f, b1_f, w2_f, b2_f, w3t_f, b3_f)

    return out_row[0, :B][:, None]


def init_params(key, state_dim):
    """Matches ValueNetwork.reset_parameters(): weights ~ U(+-1/sqrt(fan_in));
    biases keep PyTorch Linear default (same uniform range).
    Weights stored transposed vs PyTorch as (in_features, out_features)."""
    ks = jax.random.split(key, 6)

    def uniform(k, shape, fan_in):
        lim = 1.0 / math.sqrt(fan_in)
        return jax.random.uniform(k, shape, jnp.float32, -lim, lim)

    w1 = uniform(ks[0], (state_dim, HIDDEN), state_dim)
    b1 = uniform(ks[1], (1, HIDDEN), state_dim)
    w2 = uniform(ks[2], (HIDDEN, HIDDEN), HIDDEN)
    b2 = uniform(ks[3], (1, HIDDEN), HIDDEN)
    w3 = uniform(ks[4], (HIDDEN, 1), HIDDEN)
    b3 = uniform(ks[5], (1, 1), HIDDEN)
    return (w1, b1, w2, b2, w3, b3)


def reference_forward(x, params):
    """Pure-JAX reference for correctness check."""
    w1, b1, w2, b2, w3, b3 = params
    h1 = jnp.maximum(x @ w1 + b1, 0.0)
    h2 = jnp.maximum(h1 @ w2 + b2, 0.0)
    return h2 @ w3 + b3


if __name__ == "__main__":
    key = jax.random.PRNGKey(0)
    k_param, k_x = jax.random.split(key)

    batch, state_dim = 256, 32
    params = init_params(k_param, state_dim)
    x = jax.random.normal(k_x, (batch, state_dim), dtype=jnp.float32)
    ref = reference_forward(x, params)

    # Exact-size batch (single 256-row tile, no padding).
    out = jax.block_until_ready(value_network_forward(x, params))
    assert out.shape == (batch, 1)
    assert jnp.allclose(out, ref, atol=1e-4, rtol=1e-4), "f32 mismatch vs reference"

    # Ragged batch (exercises the tail-padding path).
    b_odd = 201
    out_odd = jax.block_until_ready(value_network_forward(x[:b_odd], params))
    assert out_odd.shape == (b_odd, 1)
    assert jnp.allclose(out_odd, ref[:b_odd], atol=1e-4, rtol=1e-4), \
        "ragged-batch mismatch vs reference"

    print("KERNEL_OK")
</pallas_src>

<mosaic_0001>
module attributes {stable_mosaic.version = 11 : i64} {
  func.func @value_net_kernel(%arg0: i32, %arg1: memref<256x32xf32, #tpu.memory_space<vmem>>, %arg2: memref<32x64xf32, #tpu.memory_space<vmem>>, %arg3: memref<1x64xf32, #tpu.memory_space<vmem>>, %arg4: memref<64x64xf32, #tpu.memory_space<vmem>>, %arg5: memref<1x64xf32, #tpu.memory_space<vmem>>, %arg6: memref<8x64xf32, #tpu.memory_space<vmem>>, %arg7: memref<1x1xf32, #tpu.memory_space<smem>>, %arg8: memref<1x256xf32, #tpu.memory_space<vmem>>) attributes {dimension_semantics = [#tpu.dimension_semantics<parallel>], iteration_bounds = array<i64: 1>, scalar_prefetch = 0 : i64, scratch_operands = 0 : i64, tpu.core_type = #tpu.core_type<tc>, window_params = [{transform_indices = @transform_0, window_bounds = array<i64: 256, 32>}, {pipeline_mode = #tpu.pipeline_mode<synchronous>, transform_indices = @transform_1, window_bounds = array<i64: 32, 64>}, {pipeline_mode = #tpu.pipeline_mode<synchronous>, transform_indices = @transform_2, window_bounds = array<i64: 1, 64>}, {pipeline_mode = #tpu.pipeline_mode<synchronous>, transform_indices = @transform_3, window_bounds = array<i64: 64, 64>}, {pipeline_mode = #tpu.pipeline_mode<synchronous>, transform_indices = @transform_4, window_bounds = array<i64: 1, 64>}, {pipeline_mode = #tpu.pipeline_mode<synchronous>, transform_indices = @transform_5, window_bounds = array<i64: 8, 64>}, {transform_indices = @transform_6, window_bounds = array<i64: 1, 1>}, {transform_indices = @transform_7, window_bounds = array<i64: 1, 256>}]} {
    %c0 = arith.constant 0 : index
    %c0_0 = arith.constant 0 : index
    %0 = vector.load %arg1[%c0, %c0_0] : memref<256x32xf32, #tpu.memory_space<vmem>>, vector<256x32xf32>
    %c0_1 = arith.constant 0 : index
    %c0_2 = arith.constant 0 : index
    %1 = vector.load %arg2[%c0_1, %c0_2] : memref<32x64xf32, #tpu.memory_space<vmem>>, vector<32x64xf32>
    %cst = arith.constant dense<0.000000e+00> : vector<256x64xf32>
    %2 = tpu.matmul %0, %1, %cst {dimension_numbers = #tpu.dot_dimension_numbers<[1], [0], [0], [1], [0, 0, 1, 1], [], []>} : vector<256x32xf32>, vector<32x64xf32>, vector<256x64xf32> -> vector<256x64xf32>
    %c0_3 = arith.constant 0 : index
    %c0_4 = arith.constant 0 : index
    %3 = vector.load %arg3[%c0_3, %c0_4] : memref<1x64xf32, #tpu.memory_space<vmem>>, vector<1x64xf32>
    %4 = vector.broadcast %3 : vector<1x64xf32> to vector<256x64xf32>
    %5 = arith.addf %2, %4 : vector<256x64xf32>
    %cst_5 = arith.constant 0.000000e+00 : f32
    %6 = vector.broadcast %cst_5 : f32 to vector<256x64xf32>
    %7 = arith.maximumf %5, %6 : vector<256x64xf32>
    %c0_6 = arith.constant 0 : index
    %c0_7 = arith.constant 0 : index
    %8 = vector.load %arg4[%c0_6, %c0_7] : memref<64x64xf32, #tpu.memory_space<vmem>>, vector<64x64xf32>
    %cst_8 = arith.constant dense<0.000000e+00> : vector<256x64xf32>
    %9 = tpu.matmul %7, %8, %cst_8 {dimension_numbers = #tpu.dot_dimension_numbers<[1], [0], [0], [1], [0, 0, 1, 1], [], []>} : vector<256x64xf32>, vector<64x64xf32>, vector<256x64xf32> -> vector<256x64xf32>
    %c0_9 = arith.constant 0 : index
    %c0_10 = arith.constant 0 : index
    %10 = vector.load %arg5[%c0_9, %c0_10] : memref<1x64xf32, #tpu.memory_space<vmem>>, vector<1x64xf32>
    %11 = vector.broadcast %10 : vector<1x64xf32> to vector<256x64xf32>
    %12 = arith.addf %9, %11 : vector<256x64xf32>
    %cst_11 = arith.constant 0.000000e+00 : f32
    %13 = vector.broadcast %cst_11 : f32 to vector<256x64xf32>
    %14 = arith.maximumf %12, %13 : vector<256x64xf32>
    %15 = tpu.transpose %14, [1, 0] : vector<256x64xf32> -> vector<64x256xf32>
    %c0_12 = arith.constant 0 : index
    %c0_13 = arith.constant 0 : index
    %16 = vector.load %arg6[%c0_12, %c0_13] : memref<8x64xf32, #tpu.memory_space<vmem>>, vector<8x64xf32>
    %cst_14 = arith.constant dense<0.000000e+00> : vector<8x256xf32>
    %17 = tpu.matmul %16, %15, %cst_14 {dimension_numbers = #tpu.dot_dimension_numbers<[1], [0], [0], [1], [0, 0, 1, 1], [], []>} : vector<8x64xf32>, vector<64x256xf32>, vector<8x256xf32> -> vector<8x256xf32>
    %18 = vector.extract_strided_slice %17 {offsets = [0, 0], sizes = [1, 256], strides = [1, 1]} : vector<8x256xf32> to vector<1x256xf32>
    %c0_15 = arith.constant 0 : index
    %c0_16 = arith.constant 0 : index
    %19 = memref.load %arg7[%c0_15, %c0_16] : memref<1x1xf32, #tpu.memory_space<smem>>
    %20 = vector.broadcast %19 : f32 to vector<1x256xf32>
    %21 = arith.addf %18, %20 : vector<1x256xf32>
    %c0_17 = arith.constant 0 : index
    %c0_18 = arith.constant 0 : index
    %22 = vector.load %arg8[%c0_17, %c0_18] : memref<1x256xf32, #tpu.memory_space<vmem>>, vector<1x256xf32>
    tpu.vector_store %arg8[%c0_17, %c0_18], %21 {strides = array<i32>} : memref<1x256xf32, #tpu.memory_space<vmem>>, vector<1x256xf32>,
    return
  }
  func.func @transform_0(%arg0: i32) -> (i32, i32) {
    %c0_i32 = arith.constant 0 : i32
    %c0_i32_0 = arith.constant 0 : i32
    return %arg0, %c0_i32 : i32, i32
  }
  func.func @transform_1(%arg0: i32) -> (i32, i32) {
    %c0_i32 = arith.constant 0 : i32
    %c0_i32_0 = arith.constant 0 : i32
    %c0_i32_1 = arith.constant 0 : i32
    return %c0_i32, %c0_i32_0 : i32, i32
  }
  func.func @transform_2(%arg0: i32) -> (i32, i32) {
    %c0_i32 = arith.constant 0 : i32
    %c0_i32_0 = arith.constant 0 : i32
    %c0_i32_1 = arith.constant 0 : i32
    return %c0_i32, %c0_i32_0 : i32, i32
  }
  func.func @transform_3(%arg0: i32) -> (i32, i32) {
    %c0_i32 = arith.constant 0 : i32
    %c0_i32_0 = arith.constant 0 : i32
    %c0_i32_1 = arith.constant 0 : i32
    return %c0_i32, %c0_i32_0 : i32, i32
  }
  func.func @transform_4(%arg0: i32) -> (i32, i32) {
    %c0_i32 = arith.constant 0 : i32
    %c0_i32_0 = arith.constant 0 : i32
    %c0_i32_1 = arith.constant 0 : i32
    return %c0_i32, %c0_i32_0 : i32, i32
  }
  func.func @transform_5(%arg0: i32) -> (i32, i32) {
    %c0_i32 = arith.constant 0 : i32
    %c0_i32_0 = arith.constant 0 : i32
    %c0_i32_1 = arith.constant 0 : i32
    return %c0_i32, %c0_i32_0 : i32, i32
  }
  func.func @transform_6(%arg0: i32) -> (i32, i32) {
    %c0_i32 = arith.constant 0 : i32
    %c0_i32_0 = arith.constant 0 : i32
    %c0_i32_1 = arith.constant 0 : i32
    return %c0_i32, %c0_i32_0 : i32, i32
  }
  func.func @transform_7(%arg0: i32) -> (i32, i32) {
    %c0_i32 = arith.constant 0 : i32
    %c0_i32_0 = arith.constant 0 : i32
    return %c0_i32, %arg0 : i32, i32
  }
}

</mosaic_0001>

<llo_original>
// kernel: tpu_custom_call.1
$region0: #{tpu_custom_call.1}
  #allocation0 [shape = 'u32[]', space=smem, size = 0x4, offset = 0x4, fixed_abs, tag = 'smem constant byte address 0x4 - core index']
  #allocation1 [shape = 'u32[144,128]{1,0:T(1,128)}', space=vmem, size = 0x12000, scoped, tag = 'internal scratch']
  #allocation2 [shape = 'f32[1,1]{1,0:T(1,128)S(6)}', space=smem, size = 0x200, scoped, tag = 'scoped memory for tpu_custom_call.1']
  %s0 = inlined_call_operand.vmem [shape: f32[256,32], index: 0, kind: input, shape index: {}]
  %s1 = inlined_call_operand.vmem [shape: f32[32,64], index: 1, kind: input, shape index: {}]
  %s2 = inlined_call_operand.vmem [shape: f32[1,64], index: 2, kind: input, shape index: {}]
  %s3 = inlined_call_operand.vmem [shape: f32[64,64], index: 3, kind: input, shape index: {}]
  %s4 = inlined_call_operand.vmem [shape: f32[1,64], index: 4, kind: input, shape index: {}]
  %s5 = inlined_call_operand.vmem [shape: f32[8,64], index: 5, kind: input, shape index: {}]
  %s6 = inlined_call_operand.<no memory space> [shape: f32[1,1], index: 6, kind: input, shape index: {}]
  %s7 = inlined_call_operand.hbm [shape: f32[1,256], index: 7, kind: output, shape index: {}]
  %s8 = sld [smem:[#allocation0]]
  $region38: #{tpu_custom_call.1} parent=0
    _
  %s10 = ssub.s32 1, %s8
  %s11 = scalar_select 0, %s10, %s8
  %12 = sst [smem:[#allocation2]] %s6
  $region1: #{tpu_custom_call.1} parent=0
    #allocation3 [shape = 'u8[1024]{0}', space=vmem, size = 0x400, scoped, tag = 'output window, operand 0, single buffered']
    #allocation4 [shape = 's32[1]{0}', space=sflag, size = 0x4, scoped, tag = 'scoped memory for tpu_custom_call.1']
    %13 = vsyncpa [#allocation4], 0
    // Predicated region
    $region2: #{tpu_custom_call.1} parent=1 // pred_check
      _
    $region3: #{tpu_custom_call.1} parent=1 // pred_check_branch
      %15 = sbr.rel (0) target = $region5
    $region4: #{tpu_custom_call.1} parent=1 // pred_region
      _
    $region5: #{tpu_custom_call.1} parent=1 // pred_fallthru
      _
    // Predicated region
    $region6: #{tpu_custom_call.1} parent=1 // pred_check
      _
    $region7: #{tpu_custom_call.1} parent=1 // pred_check_branch
      %17 = sbr.rel (0) target = $region9
    $region8: #{tpu_custom_call.1} parent=1 // pred_region
      _
    $region9: #{tpu_custom_call.1} parent=1 // pred_fallthru
      _
    // Predicated region
    $region10: #{tpu_custom_call.1} parent=1 // pred_check
      _
    $region11: #{tpu_custom_call.1} parent=1 // pred_check_branch
      %19 = sbr.rel (0) target = $region13
    $region12: #{tpu_custom_call.1} parent=1 // pred_region
      _
    $region13: #{tpu_custom_call.1} parent=1 // pred_fallthru
      _
    // Predicated region
    $region14: #{tpu_custom_call.1} parent=1 // pred_check
      _
    $region15: #{tpu_custom_call.1} parent=1 // pred_check_branch
      %21 = sbr.rel (0) target = $region17
    $region16: #{tpu_custom_call.1} parent=1 // pred_region
      _
    $region17: #{tpu_custom_call.1} parent=1 // pred_fallthru
      _
    // Predicated region
    $region18: #{tpu_custom_call.1} parent=1 // pred_check
      _
    $region19: #{tpu_custom_call.1} parent=1 // pred_check_branch
      %23 = sbr.rel (0) target = $region21
    $region20: #{tpu_custom_call.1} parent=1 // pred_region
      _
    $region21: #{tpu_custom_call.1} parent=1 // pred_fallthru
      _
    // Predicated region
    $region22: #{tpu_custom_call.1} parent=1 // pred_check
      _
    $region23: #{tpu_custom_call.1} parent=1 // pred_check_branch
      %25 = sbr.rel (0) target = $region25
    $region24: #{tpu_custom_call.1} parent=1 // pred_region
      _
    $region25: #{tpu_custom_call.1} parent=1 // pred_fallthru
      _
    // Predicated region
    $region26: #{tpu_custom_call.1} parent=1 // pred_check
      _
    $region27: #{tpu_custom_call.1} parent=1 // pred_check_branch
      %27 = sbr.rel (0) target = $region29
    $region28: #{tpu_custom_call.1} parent=1 // pred_region
      _
    $region29: #{tpu_custom_call.1} parent=1 // pred_fallthru
      _
    %v28 = vld [vmem:[%s0] sm:$0xff]
    %v29 = vld [vmem:[%s0 + $0x8] sm:$0xff]
    %v30 = vld [vmem:[%s0 + $0x10] sm:$0xff]
    %v31 = vld [vmem:[%s0 + $0x18] sm:$0xff]
    %v32 = vld [vmem:[%s0 + $0x20] sm:$0xff]
    %v33 = vld [vmem:[%s0 + $0x28] sm:$0xff]
    %v34 = vld [vmem:[%s0 + $0x30] sm:$0xff]
    %v35 = vld [vmem:[%s0 + $0x38] sm:$0xff]
    %v36 = vld [vmem:[%s0 + $0x40] sm:$0xff]
    %v37 = vld [vmem:[%s0 + $0x48] sm:$0xff]
    %v38 = vld [vmem:[%s0 + $0x50] sm:$0xff]
    %v39 = vld [vmem:[%s0 + $0x58] sm:$0xff]
    %v40 = vld [vmem:[%s0 + $0x60] sm:$0xff]
    %v41 = vld [vmem:[%s0 + $0x68] sm:$0xff]
    %v42 = vld [vmem:[%s0 + $0x70] sm:$0xff]
    %v43 = vld [vmem:[%s0 + $0x78] sm:$0xff]
    %v44 = vld [vmem:[%s0 + $0x80] sm:$0xff]
    %v45 = vld [vmem:[%s0 + $0x88] sm:$0xff]
    %v46 = vld [vmem:[%s0 + $0x90] sm:$0xff]
    %v47 = vld [vmem:[%s0 + $0x98] sm:$0xff]
    %v48 = vld [vmem:[%s0 + $0xa0] sm:$0xff]
    %v49 = vld [vmem:[%s0 + $0xa8] sm:$0xff]
    %v50 = vld [vmem:[%s0 + $0xb0] sm:$0xff]
    %v51 = vld [vmem:[%s0 + $0xb8] sm:$0xff]
    %v52 = vld [vmem:[%s0 + $0xc0] sm:$0xff]
    %v53 = vld [vmem:[%s0 + $0xc8] sm:$0xff]
    %v54 = vld [vmem:[%s0 + $0xd0] sm:$0xff]
    %v55 = vld [vmem:[%s0 + $0xd8] sm:$0xff]
    %v56 = vld [vmem:[%s0 + $0xe0] sm:$0xff]
    %v57 = vld [vmem:[%s0 + $0xe8] sm:$0xff]
    %v58 = vld [vmem:[%s0 + $0xf0] sm:$0xff]
    %v59 = vld [vmem:[%s0 + $0xf8] sm:$0xff]
    %v60 = vld [vmem:[%s1] sm:$0xff]
    %v61 = vld [vmem:[%s1 + $0x8] sm:$0xff]
    %v62 = vld [vmem:[%s1 + $0x10] sm:$0xff]
    %v63 = vld [vmem:[%s1 + $0x18] sm:$0xff]
    %v64 = vld [vmem:[%s2] sm:$0x1]
    %v66 = vlaneseq
    %v67 = vshrl.u32 %v66, 7
    %v68 = vsub.s32 0, %v67
    %v69 = vrot.slane %v64, %v68
    %vm71 = vcmask 261120
    %v73 = vsel %vm71, %v28, 0
    %v76 = vsel %vm71, %v29, 0
    %v79 = vsel %vm71, %v30, 0
    %v82 = vsel %vm71, %v31, 0
    %v85 = vsel %vm71, %v32, 0
    %v88 = vsel %vm71, %v33, 0
    %v91 = vsel %vm71, %v34, 0
    %v94 = vsel %vm71, %v35, 0
    %v97 = vsel %vm71, %v36, 0
    %v100 = vsel %vm71, %v37, 0
    %v103 = vsel %vm71, %v38, 0
    %v106 = vsel %vm71, %v39, 0
    %v109 = vsel %vm71, %v40, 0
    %v112 = vsel %vm71, %v41, 0
    %v115 = vsel %vm71, %v42, 0
    %v118 = vsel %vm71, %v43, 0
    %v121 = vsel %vm71, %v44, 0
    %v124 = vsel %vm71, %v45, 0
    %v127 = vsel %vm71, %v46, 0
    %v130 = vsel %vm71, %v47, 0
    %v133 = vsel %vm71, %v48, 0
    %v136 = vsel %vm71, %v49, 0
    %v139 = vsel %vm71, %v50, 0
    %v142 = vsel %vm71, %v51, 0
    %v145 = vsel %vm71, %v52, 0
    %v148 = vsel %vm71, %v53, 0
    %v151 = vsel %vm71, %v54, 0
    %v154 = vsel %vm71, %v55, 0
    %v157 = vsel %vm71, %v56, 0
    %v160 = vsel %vm71, %v57, 0
    %v163 = vsel %vm71, %v58, 0
    %v166 = vsel %vm71, %v59, 0
    %168 = vmatprep.subr.mxu0 0.0
    %169 = vmatpush1.msra.mxu0 %v60
    %170 = vmatprep.subr.mxu0 0.0
    %171 = vmatpush1.msra.mxu0 %v61
    %172 = vmatprep.subr.mxu0 0.0
    %173 = vmatpush1.msra.mxu0 %v62
    %174 = vmatprep.subr.mxu0 0.0
    %175 = vmatpush1.msra.mxu0 %v63
    %176 = vmatprep.subr.mxu0 0.0
    %177 = vmatpush1.msra.mxu0 0.0
    %178 = vmatprep.subr.mxu0 0.0
    %179 = vmatpush1.msra.mxu0 0.0
    %180 = vmatprep.subr.mxu0 0.0
    %181 = vmatpush1.msra.mxu0 0.0
    %182 = vmatprep.subr.mxu0 0.0
    %183 = vmatpush1.msra.mxu0 0.0
    %184 = vmatprep.subr.mxu0 0.0
    %185 = vmatpush1.msra.mxu0 0.0
    %186 = vmatprep.subr.mxu0 0.0
    %187 = vmatpush1.msra.mxu0 0.0
    %188 = vmatprep.subr.mxu0 0.0
    %189 = vmatpush1.msra.mxu0 0.0
    %190 = vmatprep.subr.mxu0 0.0
    %191 = vmatpush1.msra.mxu0 0.0
    %192 = vmatprep.subr.mxu0 0.0
    %193 = vmatpush1.msra.mxu0 0.0
    %194 = vmatprep.subr.mxu0 0.0
    %195 = vmatpush1.msra.mxu0 0.0
    %196 = vmatprep.subr.mxu0 0.0
    %197 = vmatpush1.msra.mxu0 0.0
    %198 = vmatprep.subr.mxu0 0.0
    %199 = vmatpush1.msra.mxu0 0.0
    %200 = vmatprep.subr.mxu0 0.0
    %201 = vmatpush1.msra.mxu0 0.0
    %202 = vmatprep.subr.mxu0 0.0
    %203 = vmatpush1.msra.mxu0 0.0
    %204 = vmatprep.subr.mxu0 0.0
    %205 = vmatpush1.msra.mxu0 0.0
    %206 = vmatprep.subr.mxu0 0.0
    %207 = vmatpush1.msra.mxu0 0.0
    %208 = vmatprep.subr.mxu0 0.0
    %209 = vmatpush1.msra.mxu0 0.0
    %210 = vmatprep.subr.mxu0 0.0
    %211 = vmatpush1.msra.mxu0 0.0
    %212 = vmatprep.subr.mxu0 0.0
    %213 = vmatpush1.msra.mxu0 0.0
    %214 = vmatprep.subr.mxu0 0.0
    %215 = vmatpush1.msra.mxu0 0.0
    %216 = vmatprep.subr.mxu0 0.0
    %217 = vmatpush1.msra.mxu0 0.0
    %218 = vmatprep.subr.mxu0 0.0
    %219 = vmatpush1.msra.mxu0 0.0
    %220 = vmatprep.subr.mxu0 0.0
    %221 = vmatpush1.msra.mxu0 0.0
    %222 = vmatprep.subr.mxu0 0.0
    %223 = vmatpush1.msra.mxu0 0.0
    %224 = vmatprep.subr.mxu0 0.0
    %225 = vmatpush1.msra.mxu0 0.0
    %226 = vmatprep.subr.mxu0 0.0
    %227 = vmatpush1.msra.mxu0 0.0
    %228 = vmatprep.subr.mxu0 0.0
    %229 = vmatpush1.msra.mxu0 0.0
    %230 = vmatprep.subr.mxu0 0.0
    %231 = vmatpush1.msra.mxu0 0.0
    %232 = vmatprep.mubr.f32.mxu0 0.0
    %233 = vmatmul.mubr.f32.gmra.mrb[0].mxu0 %v73
    %v234 = vpop.f32.mrb[0].mxu0
    %v235 = vadd.f32 %v69, %v234
    %v236 = vpop.f32.mrb[0].mxu0
    %237 = vmatprep.mubr.f32.mxu0 0.0
    %238 = vmatmul.mubr.f32.gmra.mrb[0].mxu0 %v76
    %v239 = vpop.f32.mrb[0].mxu0
    %v240 = vadd.f32 %v69, %v239
    %v241 = vpop.f32.mrb[0].mxu0
    %242 = vmatprep.mubr.f32.mxu0 0.0
    %243 = vmatmul.mubr.f32.gmra.mrb[0].mxu0 %v79
    %v244 = vpop.f32.mrb[0].mxu0
    %v245 = vadd.f32 %v69, %v244
    %v246 = vpop.f32.mrb[0].mxu0
    %247 = vmatprep.mubr.f32.mxu0 0.0
    %248 = vmatmul.mubr.f32.gmra.mrb[0].mxu0 %v82
    %v249 = vpop.f32.mrb[0].mxu0
    %v250 = vadd.f32 %v69, %v249
    %v251 = vpop.f32.mrb[0].mxu0
    %252 = vmatprep.mubr.f32.mxu0 0.0
    %253 = vmatmul.mubr.f32.gmra.mrb[0].mxu0 %v85
    %v254 = vpop.f32.mrb[0].mxu0
    %v255 = vadd.f32 %v69, %v254
    %v256 = vpop.f32.mrb[0].mxu0
    %257 = vmatprep.mubr.f32.mxu0 0.0
    %258 = vmatmul.mubr.f32.gmra.mrb[0].mxu0 %v88
    %v259 = vpop.f32.mrb[0].mxu0
    %v260 = vadd.f32 %v69, %v259
    %v261 = vpop.f32.mrb[0].mxu0
    %262 = vmatprep.mubr.f32.mxu0 0.0
    %263 = vmatmul.mubr.f32.gmra.mrb[0].mxu0 %v91
    %v264 = vpop.f32.mrb[0].mxu0
    %v265 = vadd.f32 %v69, %v264
    %v266 = vpop.f32.mrb[0].mxu0
    %267 = vmatprep.mubr.f32.mxu0 0.0
    %268 = vmatmul.mubr.f32.gmra.mrb[0].mxu0 %v94
    %v269 = vpop.f32.mrb[0].mxu0
    %v270 = vadd.f32 %v69, %v269
    %v271 = vpop.f32.mrb[0].mxu0
    %272 = vmatprep.mubr.f32.mxu0 0.0
    %273 = vmatmul.mubr.f32.gmra.mrb[0].mxu0 %v97
    %v274 = vpop.f32.mrb[0].mxu0
    %v275 = vadd.f32 %v69, %v274
    %v276 = vpop.f32.mrb[0].mxu0
    %277 = vmatprep.mubr.f32.mxu0 0.0
    %278 = vmatmul.mubr.f32.gmra.mrb[0].mxu0 %v100
    %v279 = vpop.f32.mrb[0].mxu0
    %v280 = vadd.f32 %v69, %v279
    %v281 = vpop.f32.mrb[0].mxu0
    %282 = vmatprep.mubr.f32.mxu0 0.0
    %283 = vmatmul.mubr.f32.gmra.mrb[0].mxu0 %v103
    %v284 = vpop.f32.mrb[0].mxu0
    %v285 = vadd.f32 %v69, %v284
    %v286 = vpop.f32.mrb[0].mxu0
    %287 = vmatprep.mubr.f32.mxu0 0.0
    %288 = vmatmul.mubr.f32.gmra.mrb[0].mxu0 %v106
    %v289 = vpop.f32.mrb[0].mxu0
    %v290 = vadd.f32 %v69, %v289
    %v291 = vpop.f32.mrb[0].mxu0
    %292 = vmatprep.mubr.f32.mxu0 0.0
    %293 = vmatmul.mubr.f32.gmra.mrb[0].mxu0 %v109
    %v294 = vpop.f32.mrb[0].mxu0
    %v295 = vadd.f32 %v69, %v294
    %v296 = vpop.f32.mrb[0].mxu0
    %297 = vmatprep.mubr.f32.mxu0 0.0
    %298 = vmatmul.mubr.f32.gmra.mrb[0].mxu0 %v112
    %v299 = vpop.f32.mrb[0].mxu0
    %v300 = vadd.f32 %v69, %v299
    %v301 = vpop.f32.mrb[0].mxu0
    %302 = vmatprep.mubr.f32.mxu0 0.0
    %303 = vmatmul.mubr.f32.gmra.mrb[0].mxu0 %v115
    %v304 = vpop.f32.mrb[0].mxu0
    %v305 = vadd.f32 %v69, %v304
    %v306 = vpop.f32.mrb[0].mxu0
    %307 = vmatprep.mubr.f32.mxu0 0.0
    %308 = vmatmul.mubr.f32.gmra.mrb[0].mxu0 %v118
    %v309 = vpop.f32.mrb[0].mxu0
    %v310 = vadd.f32 %v69, %v309
    %v311 = vpop.f32.mrb[0].mxu0
    %312 = vmatprep.mubr.f32.mxu0 0.0
    %313 = vmatmul.mubr.f32.gmra.mrb[0].mxu0 %v121
    %v314 = vpop.f32.mrb[0].mxu0
    %v315 = vadd.f32 %v69, %v314
    %v316 = vpop.f32.mrb[0].mxu0
    %317 = vmatprep.mubr.f32.mxu0 0.0
    %318 = vmatmul.mubr.f32.gmra.mrb[0].mxu0 %v124
    %v319 = vpop.f32.mrb[0].mxu0
    %v320 = vadd.f32 %v69, %v319
    %v321 = vpop.f32.mrb[0].mxu0
    %322 = vmatprep.mubr.f32.mxu0 0.0
    %323 = vmatmul.mubr.f32.gmra.mrb[0].mxu0 %v127
    %v324 = vpop.f32.mrb[0].mxu0
    %v325 = vadd.f32 %v69, %v324
    %v326 = vpop.f32.mrb[0].mxu0
    %327 = vmatprep.mubr.f32.mxu0 0.0
    %328 = vmatmul.mubr.f32.gmra.mrb[0].mxu0 %v130
    %v329 = vpop.f32.mrb[0].mxu0
    %v330 = vadd.f32 %v69, %v329
    %v331 = vpop.f32.mrb[0].mxu0
    %332 = vmatprep.mubr.f32.mxu0 0.0
    %333 = vmatmul.mubr.f32.gmra.mrb[0].mxu0 %v133
    %v334 = vpop.f32.mrb[0].mxu0
    %v335 = vadd.f32 %v69, %v334
    %v336 = vpop.f32.mrb[0].mxu0
    %337 = vmatprep.mubr.f32.mxu0 0.0
    %338 = vmatmul.mubr.f32.gmra.mrb[0].mxu0 %v136
    %v339 = vpop.f32.mrb[0].mxu0
    %v340 = vadd.f32 %v69, %v339
    %v341 = vpop.f32.mrb[0].mxu0
    %342 = vmatprep.mubr.f32.mxu0 0.0
    %343 = vmatmul.mubr.f32.gmra.mrb[0].mxu0 %v139
    %v344 = vpop.f32.mrb[0].mxu0
    %v345 = vadd.f32 %v69, %v344
    %v346 = vpop.f32.mrb[0].mxu0
    %347 = vmatprep.mubr.f32.mxu0 0.0
    %348 = vmatmul.mubr.f32.gmra.mrb[0].mxu0 %v142
    %v349 = vpop.f32.mrb[0].mxu0
    %v350 = vadd.f32 %v69, %v349
    %v351 = vpop.f32.mrb[0].mxu0
    %352 = vmatprep.mubr.f32.mxu0 0.0
    %353 = vmatmul.mubr.f32.gmra.mrb[0].mxu0 %v145
    %v354 = vpop.f32.mrb[0].mxu0
    %v355 = vadd.f32 %v69, %v354
    %v356 = vpop.f32.mrb[0].mxu0
    %357 = vmatprep.mubr.f32.mxu0 0.0
    %358 = vmatmul.mubr.f32.gmra.mrb[0].mxu0 %v148
    %v359 = vpop.f32.mrb[0].mxu0
    %v360 = vadd.f32 %v69, %v359
    %v361 = vpop.f32.mrb[0].mxu0
    %362 = vmatprep.mubr.f32.mxu0 0.0
    %363 = vmatmul.mubr.f32.gmra.mrb[0].mxu0 %v151
    %v364 = vpop.f32.mrb[0].mxu0
    %v365 = vadd.f32 %v69, %v364
    %v366 = vpop.f32.mrb[0].mxu0
    %367 = vmatprep.mubr.f32.mxu0 0.0
    %368 = vmatmul.mubr.f32.gmra.mrb[0].mxu0 %v154
    %v369 = vpop.f32.mrb[0].mxu0
    %v370 = vadd.f32 %v69, %v369
    %v371 = vpop.f32.mrb[0].mxu0
    %372 = vmatprep.mubr.f32.mxu0 0.0
    %373 = vmatmul.mubr.f32.gmra.mrb[0].mxu0 %v157
    %v374 = vpop.f32.mrb[0].mxu0
    %v375 = vadd.f32 %v69, %v374
    %v376 = vpop.f32.mrb[0].mxu0
    %377 = vmatprep.mubr.f32.mxu0 0.0
    %378 = vmatmul.mubr.f32.gmra.mrb[0].mxu0 %v160
    %v379 = vpop.f32.mrb[0].mxu0
    %v380 = vadd.f32 %v69, %v379
    %v381 = vpop.f32.mrb[0].mxu0
    %382 = vmatprep.mubr.f32.mxu0 0.0
    %383 = vmatmul.mubr.f32.gmra.mrb[0].mxu0 %v163
    %v384 = vpop.f32.mrb[0].mxu0
    %v385 = vadd.f32 %v69, %v384
    %v386 = vpop.f32.mrb[0].mxu0
    %387 = vmatprep.mubr.f32.mxu0 0.0
    %388 = vmatmul.mubr.f32.gmra.mrb[0].mxu0 %v166
    %v389 = vpop.f32.mrb[0].mxu0
    %v390 = vadd.f32 %v69, %v389
    %v391 = vpop.f32.mrb[0].mxu0
    %392 = vdwg.mxu0
    %v393 = vmax.f32 %v235, 0.0
    %v394 = vmax.f32 %v240, 0.0
    %v395 = vmax.f32 %v245, 0.0
    %v396 = vmax.f32 %v250, 0.0
    %v397 = vmax.f32 %v255, 0.0
    %v398 = vmax.f32 %v260, 0.0
    %v399 = vmax.f32 %v265, 0.0
    %v400 = vmax.f32 %v270, 0.0
    %v401 = vmax.f32 %v275, 0.0
    %v402 = vmax.f32 %v280, 0.0
    %v403 = vmax.f32 %v285, 0.0
    %v404 = vmax.f32 %v290, 0.0
    %v405 = vmax.f32 %v295, 0.0
    %v406 = vmax.f32 %v300, 0.0
    %v407 = vmax.f32 %v305, 0.0
    %v408 = vmax.f32 %v310, 0.0
    %v409 = vmax.f32 %v315, 0.0
    %v410 = vmax.f32 %v320, 0.0
    %v411 = vmax.f32 %v325, 0.0
    %v412 = vmax.f32 %v330, 0.0
    %v413 = vmax.f32 %v335, 0.0
    %v414 = vmax.f32 %v340, 0.0
    %v415 = vmax.f32 %v345, 0.0
    %v416 = vmax.f32 %v350, 0.0
    %v417 = vmax.f32 %v355, 0.0
    %v418 = vmax.f32 %v360, 0.0
    %v419 = vmax.f32 %v365, 0.0
    %v420 = vmax.f32 %v370, 0.0
    %v421 = vmax.f32 %v375, 0.0
    %v422 = vmax.f32 %v380, 0.0
    %v423 = vmax.f32 %v385, 0.0
    %v424 = vmax.f32 %v390, 0.0
    %v425 = vld [vmem:[%s3] sm:$0xff]
    %v426 = vld [vmem:[%s3 + $0x8] sm:$0xff]
    %v427 = vld [vmem:[%s3 + $0x10] sm:$0xff]
    %v428 = vld [vmem:[%s3 + $0x18] sm:$0xff]
    %v429 = vld [vmem:[%s3 + $0x20] sm:$0xff]
    %v430 = vld [vmem:[%s3 + $0x28] sm:$0xff]
    %v431 = vld [vmem:[%s3 + $0x30] sm:$0xff]
    %v432 = vld [vmem:[%s3 + $0x38] sm:$0xff]
    %v433 = vld [vmem:[%s4] sm:$0x1]
    %v435 = vlaneseq
    %v436 = vshrl.u32 %v435, 7
    %v437 = vsub.s32 0, %v436
    %v438 = vrot.slane %v433, %v437
    %vm440 = vcmask 523264
    %v442 = vsel %vm440, %v393, 0
    %v445 = vsel %vm440, %v394, 0
    %v448 = vsel %vm440, %v395, 0
    %v451 = vsel %vm440, %v396, 0
    %v454 = vsel %vm440, %v397, 0
    %v457 = vsel %vm440, %v398, 0
    %v460 = vsel %vm440, %v399, 0
    %v463 = vsel %vm440, %v400, 0
    %v466 = vsel %vm440, %v401, 0
    %v469 = vsel %vm440, %v402, 0
    %v472 = vsel %vm440, %v403, 0
    %v475 = vsel %vm440, %v404, 0
    %v478 = vsel %vm440, %v405, 0
    %v481 = vsel %vm440, %v406, 0
    %v484 = vsel %vm440, %v407, 0
    %v487 = vsel %vm440, %v408, 0
    %v490 = vsel %vm440, %v409, 0
    %v493 = vsel %vm440, %v410, 0
    %v496 = vsel %vm440, %v411, 0
    %v499 = vsel %vm440, %v412, 0
    %v502 = vsel %vm440, %v413, 0
    %v505 = vsel %vm440, %v414, 0
    %v508 = vsel %vm440, %v415, 0
    %v511 = vsel %vm440, %v416, 0
    %v514 = vsel %vm440, %v417, 0
    %v517 = vsel %vm440, %v418, 0
    %v520 = vsel %vm440, %v419, 0
    %v523 = vsel %vm440, %v420, 0
    %v526 = vsel %vm440, %v421, 0
    %v529 = vsel %vm440, %v422, 0
    %v532 = vsel %vm440, %v423, 0
    %v535 = vsel %vm440, %v424, 0
    %537 = vmatprep.subr.mxu0 0.0
    %538 = vmatpush1.msra.mxu0 %v425
    %539 = vmatprep.subr.mxu0 0.0
    %540 = vmatpush1.msra.mxu0 %v426
    %541 = vmatprep.subr.mxu0 0.0
    %542 = vmatpush1.msra.mxu0 %v427
    %543 = vmatprep.subr.mxu0 0.0
    %544 = vmatpush1.msra.mxu0 %v428
    %545 = vmatprep.subr.mxu0 0.0
    %546 = vmatpush1.msra.mxu0 %v429
    %547 = vmatprep.subr.mxu0 0.0
    %548 = vmatpush1.msra.mxu0 %v430
    %549 = vmatprep.subr.mxu0 0.0
    %550 = vmatpush1.msra.mxu0 %v431
    %551 = vmatprep.subr.mxu0 0.0
    %552 = vmatpush1.msra.mxu0 %v432
    %553 = vmatprep.subr.mxu0 0.0
    %554 = vmatpush1.msra.mxu0 0.0
    %555 = vmatprep.subr.mxu0 0.0
    %556 = vmatpush1.msra.mxu0 0.0
    %557 = vmatprep.subr.mxu0 0.0
    %558 = vmatpush1.msra.mxu0 0.0
    %559 = vmatprep.subr.mxu0 0.0
    %560 = vmatpush1.msra.mxu0 0.0
    %561 = vmatprep.subr.mxu0 0.0
    %562 = vmatpush1.msra.mxu0 0.0
    %563 = vmatprep.subr.mxu0 0.0
    %564 = vmatpush1.msra.mxu0 0.0
    %565 = vmatprep.subr.mxu0 0.0
    %566 = vmatpush1.msra.mxu0 0.0
    %567 = vmatprep.subr.mxu0 0.0
    %568 = vmatpush1.msra.mxu0 0.0
    %569 = vmatprep.subr.mxu0 0.0
    %570 = vmatpush1.msra.mxu0 0.0
    %571 = vmatprep.subr.mxu0 0.0
    %572 = vmatpush1.msra.mxu0 0.0
    %573 = vmatprep.subr.mxu0 0.0
    %574 = vmatpush1.msra.mxu0 0.0
    %575 = vmatprep.subr.mxu0 0.0
    %576 = vmatpush1.msra.mxu0 0.0
    %577 = vmatprep.subr.mxu0 0.0
    %578 = vmatpush1.msra.mxu0 0.0
    %579 = vmatprep.subr.mxu0 0.0
    %580 = vmatpush1.msra.mxu0 0.0
    %581 = vmatprep.subr.mxu0 0.0
    %582 = vmatpush1.msra.mxu0 0.0
    %583 = vmatprep.subr.mxu0 0.0
    %584 = vmatpush1.msra.mxu0 0.0
    %585 = vmatprep.subr.mxu0 0.0
    %586 = vmatpush1.msra.mxu0 0.0
    %587 = vmatprep.subr.mxu0 0.0
    %588 = vmatpush1.msra.mxu0 0.0
    %589 = vmatprep.subr.mxu0 0.0
    %590 = vmatpush1.msra.mxu0 0.0
    %591 = vmatprep.subr.mxu0 0.0
    %592 = vmatpush1.msra.mxu0 0.0
    %593 = vmatprep.subr.mxu0 0.0
    %594 = vmatpush1.msra.mxu0 0.0
    %595 = vmatprep.subr.mxu0 0.0
    %596 = vmatpush1.msra.mxu0 0.0
    %597 = vmatprep.subr.mxu0 0.0
    %598 = vmatpush1.msra.mxu0 0.0
    %599 = vmatprep.subr.mxu0 0.0
    %600 = vmatpush1.msra.mxu0 0.0
    %601 = vmatprep.mubr.f32.mxu0 0.0
    %602 = vmatmul.mubr.f32.gmra.mrb[0].mxu0 %v442
    %v603 = vpop.f32.mrb[0].mxu0
    %v604 = vadd.f32 %v438, %v603
    %v605 = vpop.f32.mrb[0].mxu0
    %606 = vmatprep.mubr.f32.mxu0 0.0
    %607 = vmatmul.mubr.f32.gmra.mrb[0].mxu0 %v445
    %v608 = vpop.f32.mrb[0].mxu0
    %v609 = vadd.f32 %v438, %v608
    %v610 = vpop.f32.mrb[0].mxu0
    %611 = vmatprep.mubr.f32.mxu0 0.0
    %612 = vmatmul.mubr.f32.gmra.mrb[0].mxu0 %v448
    %v613 = vpop.f32.mrb[0].mxu0
    %v614 = vadd.f32 %v438, %v613
    %v615 = vpop.f32.mrb[0].mxu0
    %616 = vmatprep.mubr.f32.mxu0 0.0
    %617 = vmatmul.mubr.f32.gmra.mrb[0].mxu0 %v451
    %v618 = vpop.f32.mrb[0].mxu0
    %v619 = vadd.f32 %v438, %v618
    %v620 = vpop.f32.mrb[0].mxu0
    %621 = vmatprep.mubr.f32.mxu0 0.0
    %622 = vmatmul.mubr.f32.gmra.mrb[0].mxu0 %v454
    %v623 = vpop.f32.mrb[0].mxu0
    %v624 = vadd.f32 %v438, %v623
    %v625 = vpop.f32.mrb[0].mxu0
    %626 = vmatprep.mubr.f32.mxu0 0.0
    %627 = vmatmul.mubr.f32.gmra.mrb[0].mxu0 %v457
    %v628 = vpop.f32.mrb[0].mxu0
    %v629 = vadd.f32 %v438, %v628
    %v630 = vpop.f32.mrb[0].mxu0
    %631 = vmatprep.mubr.f32.mxu0 0.0
    %632 = vmatmul.mubr.f32.gmra.mrb[0].mxu0 %v460
    %v633 = vpop.f32.mrb[0].mxu0
    %v634 = vadd.f32 %v438, %v633
    %v635 = vpop.f32.mrb[0].mxu0
    %636 = vmatprep.mubr.f32.mxu0 0.0
    %637 = vmatmul.mubr.f32.gmra.mrb[0].mxu0 %v463
    %v638 = vpop.f32.mrb[0].mxu0
    %v639 = vadd.f32 %v438, %v638
    %v640 = vpop.f32.mrb[0].mxu0
    %641 = vmatprep.mubr.f32.mxu0 0.0
    %642 = vmatmul.mubr.f32.gmra.mrb[0].mxu0 %v466
    %v643 = vpop.f32.mrb[0].mxu0
    %v644 = vadd.f32 %v438, %v643
    %v645 = vpop.f32.mrb[0].mxu0
    %646 = vmatprep.mubr.f32.mxu0 0.0
    %647 = vmatmul.mubr.f32.gmra.mrb[0].mxu0 %v469
    %v648 = vpop.f32.mrb[0].mxu0
    %v649 = vadd.f32 %v438, %v648
    %v650 = vpop.f32.mrb[0].mxu0
    %651 = vmatprep.mubr.f32.mxu0 0.0
    %652 = vmatmul.mubr.f32.gmra.mrb[0].mxu0 %v472
    %v653 = vpop.f32.mrb[0].mxu0
    %v654 = vadd.f32 %v438, %v653
    %v655 = vpop.f32.mrb[0].mxu0
    %656 = vmatprep.mubr.f32.mxu0 0.0
    %657 = vmatmul.mubr.f32.gmra.mrb[0].mxu0 %v475
    %v658 = vpop.f32.mrb[0].mxu0
    %v659 = vadd.f32 %v438, %v658
    %v660 = vpop.f32.mrb[0].mxu0
    %661 = vmatprep.mubr.f32.mxu0 0.0
    %662 = vmatmul.mubr.f32.gmra.mrb[0].mxu0 %v478
    %v663 = vpop.f32.mrb[0].mxu0
    %v664 = vadd.f32 %v438, %v663
    %v665 = vpop.f32.mrb[0].mxu0
    %666 = vmatprep.mubr.f32.mxu0 0.0
    %667 = vmatmul.mubr.f32.gmra.mrb[0].mxu0 %v481
    %v668 = vpop.f32.mrb[0].mxu0
    %v669 = vadd.f32 %v438, %v668
    %v670 = vpop.f32.mrb[0].mxu0
    %671 = vmatprep.mubr.f32.mxu0 0.0
    %672 = vmatmul.mubr.f32.gmra.mrb[0].mxu0 %v484
    %v673 = vpop.f32.mrb[0].mxu0
    %v674 = vadd.f32 %v438, %v673
    %v675 = vpop.f32.mrb[0].mxu0
    %676 = vmatprep.mubr.f32.mxu0 0.0
    %677 = vmatmul.mubr.f32.gmra.mrb[0].mxu0 %v487
    %v678 = vpop.f32.mrb[0].mxu0
    %v679 = vadd.f32 %v438, %v678
    %v680 = vpop.f32.mrb[0].mxu0
    %681 = vmatprep.mubr.f32.mxu0 0.0
    %682 = vmatmul.mubr.f32.gmra.mrb[0].mxu0 %v490
    %v683 = vpop.f32.mrb[0].mxu0
    %v684 = vadd.f32 %v438, %v683
    %v685 = vpop.f32.mrb[0].mxu0
    %686 = vmatprep.mubr.f32.mxu0 0.0
    %687 = vmatmul.mubr.f32.gmra.mrb[0].mxu0 %v493
    %v688 = vpop.f32.mrb[0].mxu0
    %v689 = vadd.f32 %v438, %v688
    %v690 = vpop.f32.mrb[0].mxu0
    %691 = vmatprep.mubr.f32.mxu0 0.0
    %692 = vmatmul.mubr.f32.gmra.mrb[0].mxu0 %v496
    %v693 = vpop.f32.mrb[0].mxu0
    %v694 = vadd.f32 %v438, %v693
    %v695 = vpop.f32.mrb[0].mxu0
    %696 = vmatprep.mubr.f32.mxu0 0.0
    %697 = vmatmul.mubr.f32.gmra.mrb[0].mxu0 %v499
    %v698 = vpop.f32.mrb[0].mxu0
    %v699 = vadd.f32 %v438, %v698
    %v700 = vpop.f32.mrb[0].mxu0
    %701 = vmatprep.mubr.f32.mxu0 0.0
    %702 = vmatmul.mubr.f32.gmra.mrb[0].mxu0 %v502
    %v703 = vpop.f32.mrb[0].mxu0
    %v704 = vadd.f32 %v438, %v703
    %v705 = vpop.f32.mrb[0].mxu0
    %706 = vmatprep.mubr.f32.mxu0 0.0
    %707 = vmatmul.mubr.f32.gmra.mrb[0].mxu0 %v505
    %v708 = vpop.f32.mrb[0].mxu0
    %v709 = vadd.f32 %v438, %v708
    %v710 = vpop.f32.mrb[0].mxu0
    %711 = vmatprep.mubr.f32.mxu0 0.0
    %712 = vmatmul.mubr.f32.gmra.mrb[0].mxu0 %v508
    %v713 = vpop.f32.mrb[0].mxu0
    %v714 = vadd.f32 %v438, %v713
    %v715 = vpop.f32.mrb[0].mxu0
    %716 = vmatprep.mubr.f32.mxu0 0.0
    %717 = vmatmul.mubr.f32.gmra.mrb[0].mxu0 %v511
    %v718 = vpop.f32.mrb[0].mxu0
    %v719 = vadd.f32 %v438, %v718
    %v720 = vpop.f32.mrb[0].mxu0
    %721 = vmatprep.mubr.f32.mxu0 0.0
    %722 = vmatmul.mubr.f32.gmra.mrb[0].mxu0 %v514
    %v723 = vpop.f32.mrb[0].mxu0
    %v724 = vadd.f32 %v438, %v723
    %v725 = vpop.f32.mrb[0].mxu0
    %726 = vmatprep.mubr.f32.mxu0 0.0
    %727 = vmatmul.mubr.f32.gmra.mrb[0].mxu0 %v517
    %v728 = vpop.f32.mrb[0].mxu0
    %v729 = vadd.f32 %v438, %v728
    %v730 = vpop.f32.mrb[0].mxu0
    %731 = vmatprep.mubr.f32.mxu0 0.0
    %732 = vmatmul.mubr.f32.gmra.mrb[0].mxu0 %v520
    %v733 = vpop.f32.mrb[0].mxu0
    %v734 = vadd.f32 %v438, %v733
    %v735 = vpop.f32.mrb[0].mxu0
    %736 = vmatprep.mubr.f32.mxu0 0.0
    %737 = vmatmul.mubr.f32.gmra.mrb[0].mxu0 %v523
    %v738 = vpop.f32.mrb[0].mxu0
    %v739 = vadd.f32 %v438, %v738
    %v740 = vpop.f32.mrb[0].mxu0
    %741 = vmatprep.mubr.f32.mxu0 0.0
    %742 = vmatmul.mubr.f32.gmra.mrb[0].mxu0 %v526
    %v743 = vpop.f32.mrb[0].mxu0
    %v744 = vadd.f32 %v438, %v743
    %v745 = vpop.f32.mrb[0].mxu0
    %746 = vmatprep.mubr.f32.mxu0 0.0
    %747 = vmatmul.mubr.f32.gmra.mrb[0].mxu0 %v529
    %v748 = vpop.f32.mrb[0].mxu0
    %v749 = vadd.f32 %v438, %v748
    %v750 = vpop.f32.mrb[0].mxu0
    %751 = vmatprep.mubr.f32.mxu0 0.0
    %752 = vmatmul.mubr.f32.gmra.mrb[0].mxu0 %v532
    %v753 = vpop.f32.mrb[0].mxu0
    %v754 = vadd.f32 %v438, %v753
    %v755 = vpop.f32.mrb[0].mxu0
    %756 = vmatprep.mubr.f32.mxu0 0.0
    %757 = vmatmul.mubr.f32.gmra.mrb[0].mxu0 %v535
    %v758 = vpop.f32.mrb[0].mxu0
    %v759 = vadd.f32 %v438, %v758
    %v760 = vpop.f32.mrb[0].mxu0
    %761 = vdwg.mxu0
    %v762 = vmax.f32 %v604, 0.0
    %v763 = vmax.f32 %v609, 0.0
    %v764 = vmax.f32 %v614, 0.0
    %v765 = vmax.f32 %v619, 0.0
    %v766 = vmax.f32 %v624, 0.0
    %v767 = vmax.f32 %v629, 0.0
    %v768 = vmax.f32 %v634, 0.0
    %v769 = vmax.f32 %v639, 0.0
    %v770 = vmax.f32 %v644, 0.0
    %v771 = vmax.f32 %v649, 0.0
    %v772 = vmax.f32 %v654, 0.0
    %v773 = vmax.f32 %v659, 0.0
    %v774 = vmax.f32 %v664, 0.0
    %v775 = vmax.f32 %v669, 0.0
    %v776 = vmax.f32 %v674, 0.0
    %v777 = vmax.f32 %v679, 0.0
    %v778 = vmax.f32 %v684, 0.0
    %v779 = vmax.f32 %v689, 0.0
    %v780 = vmax.f32 %v694, 0.0
    %v781 = vmax.f32 %v699, 0.0
    %v782 = vmax.f32 %v704, 0.0
    %v783 = vmax.f32 %v709, 0.0
    %v784 = vmax.f32 %v714, 0.0
    %v785 = vmax.f32 %v719, 0.0
    %v786 = vmax.f32 %v724, 0.0
    %v787 = vmax.f32 %v729, 0.0
    %v788 = vmax.f32 %v734, 0.0
    %v789 = vmax.f32 %v739, 0.0
    %v790 = vmax.f32 %v744, 0.0
    %v791 = vmax.f32 %v749, 0.0
    %v792 = vmax.f32 %v754, 0.0
    %v793 = vmax.f32 %v759, 0.0
    %v794 = vld [vmem:[%s5] sm:$0xff]
    %v796 = vsel %vm440, %v794, 0
    %v799 = vsel %vm440, %v762, 0
    %v802 = vsel %vm440, %v763, 0
    %v805 = vsel %vm440, %v764, 0
    %v808 = vsel %vm440, %v765, 0
    %v811 = vsel %vm440, %v766, 0
    %v814 = vsel %vm440, %v767, 0
    %v817 = vsel %vm440, %v768, 0
    %v820 = vsel %vm440, %v769, 0
    %v823 = vsel %vm440, %v770, 0
    %v826 = vsel %vm440, %v771, 0
    %v829 = vsel %vm440, %v772, 0
    %v832 = vsel %vm440, %v773, 0
    %v835 = vsel %vm440, %v774, 0
    %v838 = vsel %vm440, %v775, 0
    %v841 = vsel %vm440, %v776, 0
    %v844 = vsel %vm440, %v777, 0
    %v847 = vsel %vm440, %v778, 0
    %v850 = vsel %vm440, %v779, 0
    %v853 = vsel %vm440, %v780, 0
    %v856 = vsel %vm440, %v781, 0
    %v859 = vsel %vm440, %v782, 0
    %v862 = vsel %vm440, %v783, 0
    %v865 = vsel %vm440, %v784, 0
    %v868 = vsel %vm440, %v785, 0
    %v871 = vsel %vm440, %v786, 0
    %v874 = vsel %vm440, %v787, 0
    %v877 = vsel %vm440, %v788, 0
    %v880 = vsel %vm440, %v789, 0
    %v883 = vsel %vm440, %v790, 0
    %v886 = vsel %vm440, %v791, 0
    %v889 = vsel %vm440, %v792, 0
    %v892 = vsel %vm440, %v793, 0
    %894 = vmatprep.subr.mxu0 0.0
    %895 = vmatpush1.xpose.msra.mxu0 %v799
    %896 = vmatprep.subr.mxu0 0.0
    %897 = vmatpush1.xpose.msra.mxu0 %v802
    %898 = vmatprep.subr.mxu0 0.0
    %899 = vmatpush1.xpose.msra.mxu0 %v805
    %900 = vmatprep.subr.mxu0 0.0
    %901 = vmatpush1.xpose.msra.mxu0 %v808
    %902 = vmatprep.subr.mxu0 0.0
    %903 = vmatpush1.xpose.msra.mxu0 %v811
    %904 = vmatprep.subr.mxu0 0.0
    %905 = vmatpush1.xpose.msra.mxu0 %v814
    %906 = vmatprep.subr.mxu0 0.0
    %907 = vmatpush1.xpose.msra.mxu0 %v817
    %908 = vmatprep.subr.mxu0 0.0
    %909 = vmatpush1.xpose.msra.mxu0 %v820
    %910 = vmatprep.subr.mxu0 0.0
    %911 = vmatpush1.xpose.msra.mxu0 %v823
    %912 = vmatprep.subr.mxu0 0.0
    %913 = vmatpush1.xpose.msra.mxu0 %v826
    %914 = vmatprep.subr.mxu0 0.0
    %915 = vmatpush1.xpose.msra.mxu0 %v829
    %916 = vmatprep.subr.mxu0 0.0
    %917 = vmatpush1.xpose.msra.mxu0 %v832
    %918 = vmatprep.subr.mxu0 0.0
    %919 = vmatpush1.xpose.msra.mxu0 %v835
    %920 = vmatprep.subr.mxu0 0.0
    %921 = vmatpush1.xpose.msra.mxu0 %v838
    %922 = vmatprep.subr.mxu0 0.0
    %923 = vmatpush1.xpose.msra.mxu0 %v841
    %924 = vmatprep.subr.mxu0 0.0
    %925 = vmatpush1.xpose.msra.mxu0 %v844
    %926 = vmatprep.subr.mxu0 0.0
    %927 = vmatpush1.xpose.msra.mxu0 %v847
    %928 = vmatprep.subr.mxu0 0.0
    %929 = vmatpush1.xpose.msra.mxu0 %v850
    %930 = vmatprep.subr.mxu0 0.0
    %931 = vmatpush1.xpose.msra.mxu0 %v853
    %932 = vmatprep.subr.mxu0 0.0
    %933 = vmatpush1.xpose.msra.mxu0 %v856
    %934 = vmatprep.subr.mxu0 0.0
    %935 = vmatpush1.xpose.msra.mxu0 %v859
    %936 = vmatprep.subr.mxu0 0.0
    %937 = vmatpush1.xpose.msra.mxu0 %v862
    %938 = vmatprep.subr.mxu0 0.0
    %939 = vmatpush1.xpose.msra.mxu0 %v865
    %940 = vmatprep.subr.mxu0 0.0
    %941 = vmatpush1.xpose.msra.mxu0 %v868
    %942 = vmatprep.subr.mxu0 0.0
    %943 = vmatpush1.xpose.msra.mxu0 %v871
    %944 = vmatprep.subr.mxu0 0.0
    %945 = vmatpush1.xpose.msra.mxu0 %v874
    %946 = vmatprep.subr.mxu0 0.0
    %947 = vmatpush1.xpose.msra.mxu0 %v877
    %948 = vmatprep.subr.mxu0 0.0
    %949 = vmatpush1.xpose.msra.mxu0 %v880
    %950 = vmatprep.subr.mxu0 0.0
    %951 = vmatpush1.xpose.msra.mxu0 %v883
    %952 = vmatprep.subr.mxu0 0.0
    %953 = vmatpush1.xpose.msra.mxu0 %v886
    %954 = vmatprep.subr.mxu0 0.0
    %955 = vmatpush1.xpose.msra.mxu0 %v889
    %956 = vmatprep.subr.mxu0 0.0
    %957 = vmatpush1.xpose.msra.mxu0 %v892
    %958 = vmatprep.mubr.f32.mxu0 0.0
    %959 = vmatmul.mubr.f32.gmra.mrb[0].mxu0 %v796
    %v960 = vpop.f32.mrb[0].mxu0
    %v961 = vadd.f32 0.0, %v960
    %v962 = vpop.f32.mrb[0].mxu0
    %v963 = vadd.f32 0.0, %v962
    %964 = vdwg.mxu0
    %s965 = sld [smem:[#allocation2]]
    %v966 = vstv %s965
    %v967 = vadd.f32 %v961, %v966
    %v968 = vadd.f32 %v963, %v966
    %v971 = vcombine.low %v967, %v968
    %v973 = vunpack.c.l.s4 1966171168
    %v974 = vunpack.c.0.s8 %v973
    %v975 = vlaneseq
    %v976 = vshrl.u32 %v975, 7
    %v977 = vsub.s32 %v974, %v976
    %v978 = vrot.slane %v971, %v977
    %v980 = vunpack.c.l.s4 1966171168
    %v981 = vunpack.c.0.s8 %v980
    %v982 = vlaneseq
    %v983 = vshrl.u32 %v982, 7
    %v984 = vsub.s32 %v981, %v983
    %v985 = vrot.slane %v978, %v984
    %v987 = vlaneseq
    %vm988 = vcmp.ge.s32.totalorder %v987, 0
    %vm989 = vcmp.lt.s32.totalorder %v987, 256
    %vm990 = vmand %vm988, %vm989
    %991 = vst.msk [vmem:[#allocation3] sm:$0x3] %vm990, %v985
    // Predicated region
    $region30: #{tpu_custom_call.1} parent=1 // pred_check
      _
    $region31: #{tpu_custom_call.1} parent=1 // pred_check_branch
      %993 = sbr.rel (0) target = $region33
    $region32: #{tpu_custom_call.1} parent=1 // pred_region
      %s995 = ssub.s32 32, 32
      %996 = vsyncadd [#allocation4], %s995
      %s998 = sshll.u32 [#allocation3], 4
      %s999 = int_to_ptr.vmem [resolvable:$true] %s998
      %1001 = dma.vmem_to_hbm [thread:$0]  %s999, 32, %s7, [#allocation4]
    $region33: #{tpu_custom_call.1} parent=1 // pred_fallthru
      _
    // Predicated region
    $region34: #{tpu_custom_call.1} parent=1 // pred_check
      _
    $region35: #{tpu_custom_call.1} parent=1 // pred_check_branch
      %1003 = sbr.rel (0) target = $region37
    $region36: #{tpu_custom_call.1} parent=1 // pred_region
      %1004 = dma.done [#allocation4], 32
    $region37: #{tpu_custom_call.1} parent=1 // pred_fallthru
      _
    %1005 = vsyncpa [#allocation4], 1

</llo_original>
